<compile_context>
chip_gen: v7x
topology: tpu7x:2x2x1
jax: 0.10.0
libtpu: 0.0.40
codegen_flags: <defaults>
</compile_context>

<pallas_src>
import math

import jax
import jax.numpy as jnp
from jax.experimental import pallas as pl
from jax.experimental.pallas import tpu as pltpu


def _gto_kernel(feat_ref, expand_neg_ref, expand_pi_ref, out_ref):
    # feat_ref       : (TN, C)     row tile of inputs
    # expand_neg_ref : (C, C*K)    block-diagonal -|freqs|
    # expand_pi_ref  : (C, C*K)    block-diagonal |freqs| * pi
    # out_ref        : (TN, C*K)   lane-dense output tile
    f = feat_ref[...].astype(jnp.float32)                      # (TN, C)
    f2 = f * f                                                 # narrow VPU work
    # a[n, c*K+k] = -f[n,c]^2 * |fr[c,k]|   (MXU)
    a = jnp.dot(f2, expand_neg_ref[...],
                preferred_element_type=jnp.float32)            # (TN, C*K)
    # b[n, c*K+k] =  f[n,c] * |fr[c,k]| * pi   (MXU)
    b = jnp.dot(f, expand_pi_ref[...],
                preferred_element_type=jnp.float32)            # (TN, C*K)
    out_ref[...] = (jnp.exp(a) * jnp.cos(b)).astype(out_ref.dtype)


def _choose_tile_n(n, max_tile_n):
    """Row tile: multiple of 8, >=2 grid steps when possible, <= max_tile_n."""
    if n <= 8:
        return 8
    half = pl.cdiv(pl.cdiv(n, 2), 8) * 8       # split small inputs across 2 steps
    return int(min(max_tile_n, half))


def gto_forward(feat, freqs, *, max_tile_n=8192):
    """feat: (..., C), freqs: (C, K) -> (..., C, K)."""
    C, K = freqs.shape
    lead = feat.shape[:-1]
    assert feat.shape[-1] == C
    CK = C * K

    n = 1
    for d in lead:
        n *= d
    feat2 = feat.reshape(n, C)

    tile_n = _choose_tile_n(n, max_tile_n)
    grid_n = pl.cdiv(n, tile_n)                # ragged last block handled by Pallas

    # Hoisted constants: weighted block-diagonal expand matrices.
    fr = jnp.abs(freqs).astype(jnp.float32)                       # (C, K)
    fr_flat = fr.reshape(1, CK)                                   # (1, C*K)
    mask = jnp.repeat(jnp.eye(C, dtype=jnp.float32), K, axis=1)   # (C, C*K)
    expand_neg = mask * (-fr_flat)                                # -|fr| block-diag
    expand_pi = mask * (fr_flat * math.pi)                        # |fr|*pi block-diag

    out_itemsize = jnp.dtype(feat.dtype).itemsize

    # VMEM budget: lane-padded input block + output block, double-buffered,
    # plus the tiny constants.  Never below the 32 MiB default, capped at
    # 48 MiB to stay inside v7x's 64 MiB physical VMEM.
    lane = 128
    in_block = tile_n * max(lane, pl.cdiv(C, lane) * lane) * 4
    out_block = tile_n * (pl.cdiv(CK, lane) * lane) * 4
    vmem_needed = 2 * (in_block + out_block) + 4 * 8 * pl.cdiv(CK, lane) * lane * 4
    vmem_limit = int(min(max(vmem_needed + (2 << 20), 32 << 20), 48 << 20))

    cost = pl.CostEstimate(
        flops=int(4 * n * C * CK),                 # two (n,C)x(C,CK) matmuls
        transcendentals=int(2 * n * CK),           # exp + cos
        bytes_accessed=int(4 * n * C + out_itemsize * n * CK + 2 * 4 * C * CK),
    )

    out = pl.pallas_call(
        _gto_kernel,
        out_shape=jax.ShapeDtypeStruct((n, CK), feat.dtype),
        grid_spec=pltpu.PrefetchScalarGridSpec(
            num_scalar_prefetch=0,
            grid=(grid_n,),
            in_specs=[
                pl.BlockSpec((tile_n, C), lambda i: (i, 0)),
                pl.BlockSpec((C, CK), lambda i: (0, 0)),
                pl.BlockSpec((C, CK), lambda i: (0, 0)),
            ],
            out_specs=pl.BlockSpec((tile_n, CK), lambda i: (i, 0)),
        ),
        compiler_params=pltpu.CompilerParams(
            dimension_semantics=("parallel",),
            vmem_limit_bytes=vmem_limit,
        ),
        cost_estimate=cost,
    )(feat2, expand_neg, expand_pi)

    return out.reshape(*lead, C, K)


def gto_reference(feat, freqs):
    fr = jnp.abs(freqs)                       # (C, K)
    f = feat[..., None]                       # (..., C, 1)
    return jnp.exp(-(f * f) * fr) * jnp.cos(f * fr * math.pi)


def make_gto_params(in_features, out_features, eps=0.08, alpha=1.2):
    freqs = eps * jnp.power(alpha, jnp.arange(out_features, dtype=jnp.float32))
    return jnp.broadcast_to(freqs[None, :], (in_features, out_features)).astype(
        jnp.float32
    )


if __name__ == "__main__":
    in_features = 4
    out_features = 32
    batch, seq = 2, 8

    key = jax.random.PRNGKey(0)
    feat = jax.random.normal(key, (batch, seq, in_features), dtype=jnp.float32)
    freqs = make_gto_params(in_features, out_features)

    out = gto_forward(feat, freqs)
    out = jax.block_until_ready(out)

    ref = gto_reference(feat, freqs)
    assert out.shape == (batch, seq, in_features, out_features), out.shape
    assert jnp.allclose(out, ref, atol=1e-5, rtol=1e-5), float(
        jnp.max(jnp.abs(out - ref))
    )
    print("KERNEL_OK")
</pallas_src>

<mosaic_0001>
module attributes {stable_mosaic.version = 11 : i64} {
  func.func @_gto_kernel(%arg0: i32, %arg1: memref<8x4xf32, #tpu.memory_space<vmem>>, %arg2: memref<4x128xf32, #tpu.memory_space<vmem>>, %arg3: memref<4x128xf32, #tpu.memory_space<vmem>>, %arg4: memref<8x128xf32, #tpu.memory_space<vmem>>) attributes {dimension_semantics = [#tpu.dimension_semantics<parallel>], iteration_bounds = array<i64: 2>, scalar_prefetch = 0 : i64, scratch_operands = 0 : i64, tpu.core_type = #tpu.core_type<tc>, window_params = [{transform_indices = @transform_0, window_bounds = array<i64: 8, 4>}, {pipeline_mode = #tpu.pipeline_mode<synchronous>, transform_indices = @transform_1, window_bounds = array<i64: 4, 128>}, {pipeline_mode = #tpu.pipeline_mode<synchronous>, transform_indices = @transform_2, window_bounds = array<i64: 4, 128>}, {transform_indices = @transform_3, window_bounds = array<i64: 8, 128>}]} {
    %c0 = arith.constant 0 : index
    %c0_0 = arith.constant 0 : index
    %0 = vector.load %arg1[%c0, %c0_0] : memref<8x4xf32, #tpu.memory_space<vmem>>, vector<8x4xf32>
    %1 = arith.mulf %0, %0 : vector<8x4xf32>
    %c0_1 = arith.constant 0 : index
    %c0_2 = arith.constant 0 : index
    %2 = vector.load %arg2[%c0_1, %c0_2] : memref<4x128xf32, #tpu.memory_space<vmem>>, vector<4x128xf32>
    %cst = arith.constant dense<0.000000e+00> : vector<8x128xf32>
    %3 = tpu.matmul %1, %2, %cst {dimension_numbers = #tpu.dot_dimension_numbers<[1], [0], [0], [1], [0, 0, 1, 1], [], []>} : vector<8x4xf32>, vector<4x128xf32>, vector<8x128xf32> -> vector<8x128xf32>
    %c0_3 = arith.constant 0 : index
    %c0_4 = arith.constant 0 : index
    %4 = vector.load %arg3[%c0_3, %c0_4] : memref<4x128xf32, #tpu.memory_space<vmem>>, vector<4x128xf32>
    %cst_5 = arith.constant dense<0.000000e+00> : vector<8x128xf32>
    %5 = tpu.matmul %0, %4, %cst_5 {dimension_numbers = #tpu.dot_dimension_numbers<[1], [0], [0], [1], [0, 0, 1, 1], [], []>} : vector<8x4xf32>, vector<4x128xf32>, vector<8x128xf32> -> vector<8x128xf32>
    %6 = math.exp %3 : vector<8x128xf32>
    %7 = math.cos %5 : vector<8x128xf32>
    %8 = arith.mulf %6, %7 : vector<8x128xf32>
    %c0_6 = arith.constant 0 : index
    %c0_7 = arith.constant 0 : index
    %9 = vector.load %arg4[%c0_6, %c0_7] : memref<8x128xf32, #tpu.memory_space<vmem>>, vector<8x128xf32>
    tpu.vector_store %arg4[%c0_6, %c0_7], %8 {strides = array<i32>} : memref<8x128xf32, #tpu.memory_space<vmem>>, vector<8x128xf32>,
    return
  }
  func.func @transform_0(%arg0: i32) -> (i32, i32) {
    %c0_i32 = arith.constant 0 : i32
    %c0_i32_0 = arith.constant 0 : i32
    return %arg0, %c0_i32 : i32, i32
  }
  func.func @transform_1(%arg0: i32) -> (i32, i32) {
    %c0_i32 = arith.constant 0 : i32
    %c0_i32_0 = arith.constant 0 : i32
    %c0_i32_1 = arith.constant 0 : i32
    return %c0_i32, %c0_i32_0 : i32, i32
  }
  func.func @transform_2(%arg0: i32) -> (i32, i32) {
    %c0_i32 = arith.constant 0 : i32
    %c0_i32_0 = arith.constant 0 : i32
    %c0_i32_1 = arith.constant 0 : i32
    return %c0_i32, %c0_i32_0 : i32, i32
  }
  func.func @transform_3(%arg0: i32) -> (i32, i32) {
    %c0_i32 = arith.constant 0 : i32
    %c0_i32_0 = arith.constant 0 : i32
    return %arg0, %c0_i32 : i32, i32
  }
}

</mosaic_0001>

<llo_original>
// kernel: tpu_custom_call.1
$region0: #{tpu_custom_call.1}
  #allocation0 [shape = 'u32[]', space=smem, size = 0x4, offset = 0x4, fixed_abs, tag = 'smem constant byte address 0x4 - core index']
  #allocation1 [shape = 'u32[144,128]{1,0:T(1,128)}', space=vmem, size = 0x12000, scoped, tag = 'internal scratch']
  %s0 = inlined_call_operand.vmem [shape: f32[16,4], index: 0, kind: input, shape index: {}]
  %s1 = inlined_call_operand.vmem [shape: f32[4,128], index: 1, kind: input, shape index: {}]
  %s2 = inlined_call_operand.vmem [shape: f32[4,128], index: 2, kind: input, shape index: {}]
  %s3 = inlined_call_operand.hbm [shape: f32[16,128], index: 3, kind: output, shape index: {}]
  %s4 = sld [smem:[#allocation0]]
  $region45: #{tpu_custom_call.1} parent=0
    _
  %s6 = ssub.s32 1, %s4
  %s7 = scalar_select 0, %s6, %s4
  $region1: #{tpu_custom_call.1} parent=0
    #allocation2 [shape = 'u8[8192]{0}', space=vmem, size = 0x2000, scoped, tag = 'output window, operand 0']
    #allocation3 [shape = 's32[2]{0}', space=sflag, size = 0x8, scoped, tag = 'scoped memory for tpu_custom_call.1']
    %8 = vsyncpa [#allocation3], 0
    %s9 = scalar_lea.sflag [#allocation3], 1
    %10 = vsyncpa %s9, 0
    loop: start=0, step=1, limit=4
    $region2: #{tpu_custom_call.1} parent=1 // loop_pre_header
      _
    $region3: #{tpu_custom_call.1} parent=1 // loop_header
      %s12 = sphi 0, %s16
      %p13 = scmp.ge.s32.totalorder %s12, 4
      %s22 = sphi 0, %s24
      %s25 = sphi 0, %s22
      %s26 = sphi 0, %s25
      %s42 = sphi 0, %s26
      %s46 = sphi 0, %s46
      %s48 = sphi 0, %s46
      %s49 = sphi 0, %s48
      %s63 = sphi 0, %s49
      %s67 = sphi 0, %s67
      %s69 = sphi 0, %s67
      %s70 = sphi 0, %s69
      %s84 = sphi 0, %s70
      %s90 = sphi 0, %s92
      %s93 = sphi 0, %s90
      %s94 = sphi 0, %s93
      %s110 = sphi 0, %s94
    $region4: #{tpu_custom_call.1} parent=1 // loop_header_branch
      %15 = sbr.rel (%p13) target = $region8
    $region5: #{tpu_custom_call.1} parent=1 // loop_body
      %s17 = ssub.s32 %s12, 1
      %s18 = ssub.s32 %s12, 2
      %s19 = sadd.s32 %s12, 1
      %s20 = ssub.s32 %s12, %s19
      %p21 = scmp.eq.s32.totalorder %s20, 0
      %s23 = sadd.s32 %s22, 1
      %s24 = scalar_select %p21, %s22, %s23
      %p27 = pneg %p21
      %p28 = scmp.eq.s32.totalorder %s12, 1
      %p29 = por %p27, %p28
      %p30 = scmp.ne.s32.totalorder %s22, %s25
      %p31 = scmp.eq.s32.totalorder %s12, 0
      %p32 = por %p30, %p31
      %p33 = scmp.ne.s32.totalorder %s22, %s25
      %p34 = scmp.eq.s32.totalorder %s17, 1
      %p35 = por %p33, %p34
      %p36 = scmp.ne.s32.totalorder %s25, %s26
      %p37 = scmp.eq.s32.totalorder %s17, 0
      %p38 = por %p36, %p37
      %p39 = scmp.ne.s32.totalorder %s25, %s26
      %p40 = scmp.eq.s32.totalorder %s18, 1
      %p41 = por %p39, %p40
      %p43 = scmp.ne.s32.totalorder %s26, %s42
      %p44 = scmp.eq.s32.totalorder %s18, 0
      %p45 = por %p43, %p44
      %s47 = sadd.s32 %s46, 1
      %p50 = scmp.eq.s32.totalorder %s12, 1
      %p51 = scmp.ne.s32.totalorder %s46, %s48
      %p52 = scmp.eq.s32.totalorder %s12, 0
      %p53 = por %p51, %p52
      %p54 = scmp.ne.s32.totalorder %s46, %s48
      %p55 = scmp.eq.s32.totalorder %s17, 1
      %p56 = por %p54, %p55
      %p57 = scmp.ne.s32.totalorder %s48, %s49
      %p58 = scmp.eq.s32.totalorder %s17, 0
      %p59 = por %p57, %p58
      %p60 = scmp.ne.s32.totalorder %s48, %s49
      %p61 = scmp.eq.s32.totalorder %s18, 1
      %p62 = por %p60, %p61
      %p64 = scmp.ne.s32.totalorder %s49, %s63
      %p65 = scmp.eq.s32.totalorder %s18, 0
      %p66 = por %p64, %p65
      %s68 = sadd.s32 %s67, 1
      %p71 = scmp.eq.s32.totalorder %s12, 1
      %p72 = scmp.ne.s32.totalorder %s67, %s69
      %p73 = scmp.eq.s32.totalorder %s12, 0
      %p74 = por %p72, %p73
      %p75 = scmp.ne.s32.totalorder %s67, %s69
      %p76 = scmp.eq.s32.totalorder %s17, 1
      %p77 = por %p75, %p76
      %p78 = scmp.ne.s32.totalorder %s69, %s70
      %p79 = scmp.eq.s32.totalorder %s17, 0
      %p80 = por %p78, %p79
      %p81 = scmp.ne.s32.totalorder %s69, %s70
      %p82 = scmp.eq.s32.totalorder %s18, 1
      %p83 = por %p81, %p82
      %p85 = scmp.ne.s32.totalorder %s70, %s84
      %p86 = scmp.eq.s32.totalorder %s18, 0
      %p87 = por %p85, %p86
      %s88 = ssub.s32 %s12, %s19
      %p89 = scmp.eq.s32.totalorder %s88, 0
      %s91 = sadd.s32 %s90, 1
      %s92 = scalar_select %p89, %s90, %s91
      %p95 = pneg %p89
      %p96 = scmp.eq.s32.totalorder %s12, 1
      %p97 = por %p95, %p96
      %p98 = scmp.ne.s32.totalorder %s90, %s93
      %p99 = scmp.eq.s32.totalorder %s12, 0
      %p100 = por %p98, %p99
      %p101 = scmp.ne.s32.totalorder %s90, %s93
      %p102 = scmp.eq.s32.totalorder %s17, 1
      %p103 = por %p101, %p102
      %p104 = scmp.ne.s32.totalorder %s93, %s94
      %p105 = scmp.eq.s32.totalorder %s17, 0
      %p106 = por %p104, %p105
      %p107 = scmp.ne.s32.totalorder %s93, %s94
      %p108 = scmp.eq.s32.totalorder %s18, 1
      %p109 = por %p107, %p108
      %p111 = scmp.ne.s32.totalorder %s94, %s110
      %p112 = scmp.eq.s32.totalorder %s18, 0
      %p113 = por %p111, %p112
      %p114 = scmp.le.s32.totalorder 1, %s12
      %p115 = scmp.lt.s32.totalorder %s12, 3
      %p116 = pnand %p114, %p115
      %p117 = pneg %p116
      // Predicated region
      $region9: #{tpu_custom_call.1} parent=5 // pred_check
        _
      $region10: #{tpu_custom_call.1} parent=5 // pred_check_branch
        %119 = sbr.rel (%p116) target = $region12
      $region11: #{tpu_custom_call.1} parent=5 // pred_region
        %s120 = ssub.s32 %s12, 1
        // Predicated region
        $region13: #{tpu_custom_call.1} parent=11 // pred_check
          %p121 = pneg %p59
        $region14: #{tpu_custom_call.1} parent=11 // pred_check_branch
          %123 = sbr.rel (%p121) target = $region16
        $region15: #{tpu_custom_call.1} parent=11 // pred_region
          _
        $region16: #{tpu_custom_call.1} parent=11 // pred_fallthru
          _
        // Predicated region
        $region17: #{tpu_custom_call.1} parent=11 // pred_check
          %p124 = pneg %p80
        $region18: #{tpu_custom_call.1} parent=11 // pred_check_branch
          %126 = sbr.rel (%p124) target = $region20
        $region19: #{tpu_custom_call.1} parent=11 // pred_region
          _
        $region20: #{tpu_custom_call.1} parent=11 // pred_fallthru
          _
      $region12: #{tpu_custom_call.1} parent=5 // pred_fallthru
        _
      %p127 = scmp.lt.s32.totalorder %s12, 2
      // Predicated region
      $region21: #{tpu_custom_call.1} parent=5 // pred_check
        %p128 = pneg %p127
      $region22: #{tpu_custom_call.1} parent=5 // pred_check_branch
        %130 = sbr.rel (%p128) target = $region24
      $region23: #{tpu_custom_call.1} parent=5 // pred_region
        // Predicated region
        $region25: #{tpu_custom_call.1} parent=23 // pred_check
          %p131 = pneg %p32
        $region26: #{tpu_custom_call.1} parent=23 // pred_check_branch
          %133 = sbr.rel (%p131) target = $region28
        $region27: #{tpu_custom_call.1} parent=23 // pred_region
          %p134 = scmp.lt.s32.totalorder %s12, 1
          %s135 = scalar_select %p134, %s12, 1
          %s136 = smul.addr %s135, 8
          %s137 = scalar_lea.vmem %s0, %s136
        $region28: #{tpu_custom_call.1} parent=23 // pred_fallthru
          _
      $region24: #{tpu_custom_call.1} parent=5 // pred_fallthru
        _
      %p138 = scmp.le.s32.totalorder 1, %s12
      %p139 = scmp.lt.s32.totalorder %s12, 3
      %p140 = pnand %p138, %p139
      %p141 = pneg %p140
      // Predicated region
      $region29: #{tpu_custom_call.1} parent=5 // pred_check
        _
      $region30: #{tpu_custom_call.1} parent=5 // pred_check_branch
        %143 = sbr.rel (%p140) target = $region32
      $region31: #{tpu_custom_call.1} parent=5 // pred_region
        %s144 = ssub.s32 %s12, 1
        %p145 = scmp.lt.s32.totalorder %s17, 1
        %s146 = scalar_select %p145, %s17, 1
        %s147 = smul.addr %s146, 8
        %s148 = scalar_lea.vmem %s0, %s147
        %p149 = pneg %p38
        %p150 = pneg %p35
        %p151 = pneg %p59
        %p152 = pneg %p56
        %p153 = pneg %p80
        %p154 = pneg %p77
        %p155 = pneg %p106
        %p156 = pneg %p103
        %s157 = sand.u32 %s93, 1
        %s158 = scalar_lea.sflag [#allocation3], %s157
        %s159 = sand.u32 %s93, 1
        %s160 = smul.addr %s159, 8
        %s161 = scalar_lea.vmem [#allocation2], %s160
        %p162 = scmp.lt.s32.totalorder %s17, 1
        %s163 = scalar_select %p162, %s17, 1
        %s164 = smul.addr %s163, 8
        %s165 = scalar_lea.vmem %s0, %s164
        %v166 = vld [vmem:[%s165] sm:$0xff]
        %v167 = vmul.f32 %v166, %v166
        %v168 = vld [vmem:[%s1] sm:$0xf]
        %vm169 = vcmask 31744
        %v171 = vsel %vm169, %v167, 0
        %vm173 = vcmask 1043456
        %v175 = vsel %vm173, %v168, 0
        %177 = vmatprep.subr.mxu0 0.0
        %178 = vmatpush1.msra.mxu0 %v175
        %179 = vmatprep.subr.mxu0 0.0
        %180 = vmatpush1.msra.mxu0 0.0
        %181 = vmatprep.subr.mxu0 0.0
        %182 = vmatpush1.msra.mxu0 0.0
        %183 = vmatprep.subr.mxu0 0.0
        %184 = vmatpush1.msra.mxu0 0.0
        %185 = vmatprep.subr.mxu0 0.0
        %186 = vmatpush1.msra.mxu0 0.0
        %187 = vmatprep.subr.mxu0 0.0
        %188 = vmatpush1.msra.mxu0 0.0
        %189 = vmatprep.subr.mxu0 0.0
        %190 = vmatpush1.msra.mxu0 0.0
        %191 = vmatprep.subr.mxu0 0.0
        %192 = vmatpush1.msra.mxu0 0.0
        %193 = vmatprep.subr.mxu0 0.0
        %194 = vmatpush1.msra.mxu0 0.0
        %195 = vmatprep.subr.mxu0 0.0
        %196 = vmatpush1.msra.mxu0 0.0
        %197 = vmatprep.subr.mxu0 0.0
        %198 = vmatpush1.msra.mxu0 0.0
        %199 = vmatprep.subr.mxu0 0.0
        %200 = vmatpush1.msra.mxu0 0.0
        %201 = vmatprep.subr.mxu0 0.0
        %202 = vmatpush1.msra.mxu0 0.0
        %203 = vmatprep.subr.mxu0 0.0
        %204 = vmatpush1.msra.mxu0 0.0
        %205 = vmatprep.subr.mxu0 0.0
        %206 = vmatpush1.msra.mxu0 0.0
        %207 = vmatprep.subr.mxu0 0.0
        %208 = vmatpush1.msra.mxu0 0.0
        %209 = vmatprep.subr.mxu0 0.0
        %210 = vmatpush1.msra.mxu0 0.0
        %211 = vmatprep.subr.mxu0 0.0
        %212 = vmatpush1.msra.mxu0 0.0
        %213 = vmatprep.subr.mxu0 0.0
        %214 = vmatpush1.msra.mxu0 0.0
        %215 = vmatprep.subr.mxu0 0.0
        %216 = vmatpush1.msra.mxu0 0.0
        %217 = vmatprep.subr.mxu0 0.0
        %218 = vmatpush1.msra.mxu0 0.0
        %219 = vmatprep.subr.mxu0 0.0
        %220 = vmatpush1.msra.mxu0 0.0
        %221 = vmatprep.subr.mxu0 0.0
        %222 = vmatpush1.msra.mxu0 0.0
        %223 = vmatprep.subr.mxu0 0.0
        %224 = vmatpush1.msra.mxu0 0.0
        %225 = vmatprep.subr.mxu0 0.0
        %226 = vmatpush1.msra.mxu0 0.0
        %227 = vmatprep.subr.mxu0 0.0
        %228 = vmatpush1.msra.mxu0 0.0
        %229 = vmatprep.subr.mxu0 0.0
        %230 = vmatpush1.msra.mxu0 0.0
        %231 = vmatprep.subr.mxu0 0.0
        %232 = vmatpush1.msra.mxu0 0.0
        %233 = vmatprep.subr.mxu0 0.0
        %234 = vmatpush1.msra.mxu0 0.0
        %235 = vmatprep.subr.mxu0 0.0
        %236 = vmatpush1.msra.mxu0 0.0
        %237 = vmatprep.subr.mxu0 0.0
        %238 = vmatpush1.msra.mxu0 0.0
        %239 = vmatprep.subr.mxu0 0.0
        %240 = vmatpush1.msra.mxu0 0.0
        %241 = vmatprep.mubr.f32.mxu0 0.0
        %242 = vmatmul.mubr.f32.gmra.mrb[0].mxu0 %v171
        %v243 = vpop.f32.mrb[0].mxu0
        %v244 = vadd.f32 0.0, %v243
        %v245 = vpop.f32.mrb[0].mxu0
        %246 = vdwg.mxu0
        %v247 = vld [vmem:[%s2] sm:$0xf]
        %v249 = vsel %vm169, %v166, 0
        %v252 = vsel %vm173, %v247, 0
        %254 = vmatprep.subr.mxu0 0.0
        %255 = vmatpush1.msra.mxu0 %v252
        %256 = vmatprep.subr.mxu0 0.0
        %257 = vmatpush1.msra.mxu0 0.0
        %258 = vmatprep.subr.mxu0 0.0
        %259 = vmatpush1.msra.mxu0 0.0
        %260 = vmatprep.subr.mxu0 0.0
        %261 = vmatpush1.msra.mxu0 0.0
        %262 = vmatprep.subr.mxu0 0.0
        %263 = vmatpush1.msra.mxu0 0.0
        %264 = vmatprep.subr.mxu0 0.0
        %265 = vmatpush1.msra.mxu0 0.0
        %266 = vmatprep.subr.mxu0 0.0
        %267 = vmatpush1.msra.mxu0 0.0
        %268 = vmatprep.subr.mxu0 0.0
        %269 = vmatpush1.msra.mxu0 0.0
        %270 = vmatprep.subr.mxu0 0.0
        %271 = vmatpush1.msra.mxu0 0.0
        %272 = vmatprep.subr.mxu0 0.0
        %273 = vmatpush1.msra.mxu0 0.0
        %274 = vmatprep.subr.mxu0 0.0
        %275 = vmatpush1.msra.mxu0 0.0
        %276 = vmatprep.subr.mxu0 0.0
        %277 = vmatpush1.msra.mxu0 0.0
        %278 = vmatprep.subr.mxu0 0.0
        %279 = vmatpush1.msra.mxu0 0.0
        %280 = vmatprep.subr.mxu0 0.0
        %281 = vmatpush1.msra.mxu0 0.0
        %282 = vmatprep.subr.mxu0 0.0
        %283 = vmatpush1.msra.mxu0 0.0
        %284 = vmatprep.subr.mxu0 0.0
        %285 = vmatpush1.msra.mxu0 0.0
        %286 = vmatprep.subr.mxu0 0.0
        %287 = vmatpush1.msra.mxu0 0.0
        %288 = vmatprep.subr.mxu0 0.0
        %289 = vmatpush1.msra.mxu0 0.0
        %290 = vmatprep.subr.mxu0 0.0
        %291 = vmatpush1.msra.mxu0 0.0
        %292 = vmatprep.subr.mxu0 0.0
        %293 = vmatpush1.msra.mxu0 0.0
        %294 = vmatprep.subr.mxu0 0.0
        %295 = vmatpush1.msra.mxu0 0.0
        %296 = vmatprep.subr.mxu0 0.0
        %297 = vmatpush1.msra.mxu0 0.0
        %298 = vmatprep.subr.mxu0 0.0
        %299 = vmatpush1.msra.mxu0 0.0
        %300 = vmatprep.subr.mxu0 0.0
        %301 = vmatpush1.msra.mxu0 0.0
        %302 = vmatprep.subr.mxu0 0.0
        %303 = vmatpush1.msra.mxu0 0.0
        %304 = vmatprep.subr.mxu0 0.0
        %305 = vmatpush1.msra.mxu0 0.0
        %306 = vmatprep.subr.mxu0 0.0
        %307 = vmatpush1.msra.mxu0 0.0
        %308 = vmatprep.subr.mxu0 0.0
        %309 = vmatpush1.msra.mxu0 0.0
        %310 = vmatprep.subr.mxu0 0.0
        %311 = vmatpush1.msra.mxu0 0.0
        %312 = vmatprep.subr.mxu0 0.0
        %313 = vmatpush1.msra.mxu0 0.0
        %314 = vmatprep.subr.mxu0 0.0
        %315 = vmatpush1.msra.mxu0 0.0
        %316 = vmatprep.subr.mxu0 0.0
        %317 = vmatpush1.msra.mxu0 0.0
        %318 = vmatprep.mubr.f32.mxu0 0.0
        %319 = vmatmul.mubr.f32.gmra.mrb[0].mxu0 %v249
        %v320 = vpop.f32.mrb[0].mxu0
        %v321 = vadd.f32 0.0, %v320
        %v322 = vpop.f32.mrb[0].mxu0
        %323 = vdwg.mxu0
        %v324 = vmul.f32 %v244, 1.442695
        %v325 = vpow.pop %v324
        %v326 = vand.u32 2147483647, %v321
        %vm327 = vcmp.le.f32.partialorder %v326, 0.7853982
        %vm328 = vcmp.lt.s32.totalorder %v321, 0
        %v329 = vand.u32 %v321, 2139095040
        %v330 = vshrl.u32 %v329, 23
        %v331 = vsub.s32 %v330, 127
        %v332 = vand.u32 2147483647, %v321
        %v333 = vand.u32 %v332, 8388607
        %v334 = vor.u32 %v333, 8388608
        %v335 = vsub.s32 0, %v334
        %v336 = vadd.s32 %v331, 1
        %vm337 = vcmp.gt.s32.totalorder %v336, 0
        %v338 = vsel %vm337, %v336, 0
        %v339 = vshrl.u32 %v338, 5
        %v340 = vand.u32 %v338, 31
        %v341 = vsub.s32 32, %v340
        %v342 = vshrl.u32 683565275, %v341
        %v343 = vshll.u32 683565275, %v340
        %v344 = vshrl.u32 2475754826, %v341
        %v345 = vor.u32 %v343, %v344
        %v346 = vshll.u32 2475754826, %v340
        %v347 = vshrl.u32 2131351028, %v341
        %v348 = vor.u32 %v346, %v347
        %v349 = vshll.u32 2131351028, %v340
        %v350 = vshrl.u32 2102212464, %v341
        %v351 = vor.u32 %v349, %v350
        %v352 = vshll.u32 2102212464, %v340
        %v353 = vshrl.u32 920167782, %v341
        %v354 = vor.u32 %v352, %v353
        %v355 = vshll.u32 920167782, %v340
        %v356 = vshrl.u32 1326507024, %v341
        %v357 = vor.u32 %v355, %v356
        %vm358 = vcmp.lt.s32.totalorder %v339, 1
        %vm359 = vcmp.lt.s32.totalorder %v339, 2
        %vm360 = vcmp.lt.s32.totalorder %v339, 3
        %vm361 = vcmp.lt.s32.totalorder %v339, 4
        %v362 = vsel %vm358, %v342, %v345
        %v363 = vsel %vm361, %v351, 2102212464
        %v364 = vsel %vm360, %v348, %v363
        %v365 = vsel %vm359, %v362, %v364
        %v366 = vsel %vm358, %v345, %v348
        %v367 = vsel %vm361, %v354, 920167782
        %v368 = vsel %vm360, %v351, %v367
        %v369 = vsel %vm359, %v366, %v368
        %v370 = vsel %vm358, %v348, %v351
        %v371 = vsel %vm361, %v357, 1326507024
        %v372 = vsel %vm360, %v354, %v371
        %v373 = vsel %vm359, %v370, %v372
        %v374 = vshll.u32 %v334, 8
        %v375 = vmul.u32.u64.compose %v374, %v373
        %v376 = vextract.low.u32 %v375
        %v377 = vextract.high.u32 %v375
        %v378 = vmul.u32.u64.compose %v374, %v369
        %v379 = vextract.low.u32 %v378
        %v380 = vextract.high.u32 %v378
        %v381 = vmul.u32 %v374, %v365
        %v382 = vadd.s32 %v377, %v379
        %vm383 = vc.u32 %v377, %v379
        %v384 = vadd.s32 %v380, 1
        %v385 = vsel %vm383, %v384, %v380
        %v386 = vadd.s32 %v381, %v385
        %v387 = vadd.s32 %v386, 536870912
        %v388 = vshrl.u32 %v387, 30
        %v389 = vshll.u32 %v388, 30
        %v390 = vsub.s32 %v386, %v389
        %vm391 = vcmp.lt.s32.totalorder %v390, 0
        %v392 = vsub.s32 0, %v390
        %v393 = vsel %vm391, %v392, %v390
        %v394 = vclz %v393
        %v395 = vsub.s32 %v394, 2
        %vm396 = vcmp.gt.s32.totalorder 0, %v395
        %v397 = vsel %vm396, 0, %v395
        %v398 = vsub.s32 32, %v397
        %v399 = vshll.u32 %v390, %v397
        %v400 = vshrl.u32 %v382, %v398
        %v401 = vor.u32 %v399, %v400
        %v402 = vsub.s32 4294967266, %v397
        %v403 = vadd.s32 %v402, 127
        %v404 = vshll.u32 %v403, 23
        %v405 = vor.u32 4788187, %v404
        %v406 = vand.u32 2147483647, %v405
        %v408 = vcvt.s32.f32 %v401
        %v409 = vmul.f32 %v408, %v406
        %v410 = vxor.u32 %v409, 2147483648
        %v411 = vsel %vm328, %v410, %v409
        %v412 = vsub.s32 4, %v388
        %v413 = vsel %vm328, %v412, %v388
        %v414 = vsel %vm327, %v321, %v411
        %v415 = vsel %vm327, 0, %v413
        %v416 = vcosq.f32.pop %v414
        %v417 = vsinq.f32.pop %v414
        %vm418 = vweird.f32 %v321
        %v419 = vand.u32 %v415, 3
        %vm420 = vcmp.lt.s32.totalorder %v419, 2
        %vm421 = vcmp.eq.s32.totalorder %v419, 0
        %v422 = vxor.u32 %v417, 2147483648
        %v423 = vsel %vm421, %v416, %v422
        %vm424 = vcmp.eq.s32.totalorder %v419, 2
        %v425 = vxor.u32 %v416, 2147483648
        %v426 = vsel %vm424, %v425, %v417
        %v427 = vsel %vm420, %v423, %v426
        %v428 = vsel %vm418, nan, %v427
        %v429 = vmul.f32 %v325, %v428
        %430 = vst [vmem:[%s161] sm:$0xff] %v429
        %s431 = sand.u32 %s93, 1
        %s432 = scalar_lea.sflag [#allocation3], %s431
        %s433 = sand.u32 %s93, 1
        %s434 = smul.addr %s433, 8
        %s435 = scalar_lea.vmem [#allocation2], %s434
        // Predicated region
        $region33: #{tpu_custom_call.1} parent=31 // pred_check
          %p436 = pneg %p103
        $region34: #{tpu_custom_call.1} parent=31 // pred_check_branch
          %438 = sbr.rel (%p436) target = $region36
        $region35: #{tpu_custom_call.1} parent=31 // pred_region
          %s440 = ssub.s32 128, 128
          %441 = vsyncadd %s432, %s440
          %s442 = smul.addr %s17, 128
          %s443 = scalar_lea.hbm %s3, %s442
          %s445 = sshll.u32 %s435, 4
          %s446 = int_to_ptr.vmem [resolvable:$true] %s445
          %448 = dma.vmem_to_hbm [thread:$0]  %s446, 128, %s443, %s432
        $region36: #{tpu_custom_call.1} parent=31 // pred_fallthru
          _
      $region32: #{tpu_custom_call.1} parent=5 // pred_fallthru
        _
      %p449 = scmp.le.s32.totalorder 2, %s12
      // Predicated region
      $region37: #{tpu_custom_call.1} parent=5 // pred_check
        %p450 = pneg %p449
      $region38: #{tpu_custom_call.1} parent=5 // pred_check_branch
        %452 = sbr.rel (%p450) target = $region40
      $region39: #{tpu_custom_call.1} parent=5 // pred_region
        %s453 = ssub.s32 %s12, 2
        // Predicated region
        $region41: #{tpu_custom_call.1} parent=39 // pred_check
          %p454 = pneg %p109
        $region42: #{tpu_custom_call.1} parent=39 // pred_check_branch
          %456 = sbr.rel (%p454) target = $region44
        $region43: #{tpu_custom_call.1} parent=39 // pred_region
          %s457 = sand.u32 %s94, 1
          %s458 = scalar_lea.sflag [#allocation3], %s457
          %s459 = sand.u32 %s94, 1
          %s460 = smul.addr %s459, 8
          %s461 = scalar_lea.vmem [#allocation2], %s460
          %462 = dma.done %s458, 128
        $region44: #{tpu_custom_call.1} parent=39 // pred_fallthru
          _
      $region40: #{tpu_custom_call.1} parent=5 // pred_fallthru
        _
    $region6: #{tpu_custom_call.1} parent=1 // loop_footer
      %s16 = sadd.s32 1, %s12
    $region7: #{tpu_custom_call.1} parent=1 // loop_footer_branch
      %11 = sbr.rel target = $region3
    $region8: #{tpu_custom_call.1} parent=1 // loop_exit
      _
    %463 = vsyncpa [#allocation3], 1
    %s464 = scalar_lea.sflag [#allocation3], 1
    %465 = vsyncpa %s464, 1

</llo_original>
